<compile_context>
chip_gen: v7x
topology: tpu7x:2x2x1
jax: 0.10.0
libtpu: 0.0.40
codegen_flags: <defaults>
</compile_context>

<pallas_src>
import functools

import jax
import jax.numpy as jnp
from jax.experimental import pallas as pl
from jax.experimental.pallas import tpu as pltpu


def _round_up(x, m):
    return ((x + m - 1) // m) * m


def _fit_tile(dim, cap):
    """Largest multiple of 128 <= cap, but no larger than dim rounded to 128."""
    cap = max(128, (cap // 128) * 128)
    return min(cap, _round_up(dim, 128))


def backproject_kernel(yf_ref, bp_ref, bias_ref, o_ref, *, tk):
    # yf_ref  : (M, ADp)  bf16, channel-collapsed + filtered sinogram rows,
    #                     VMEM-resident (constant index_map)
    # bp_ref  : (TK, TN)  bf16, streamed back-projection tile
    # bias_ref: (1,)      f32 scalar bias in SMEM
    # o_ref   : (M, TN)   f32 output image tile; block index is constant across
    #                     the k axis, so it doubles as the accumulator.
    k = pl.program_id(1)

    @pl.when(k == 0)
    def _init():
        o_ref[...] = jnp.zeros_like(o_ref) + bias_ref[0]

    start = pl.multiple_of(k * tk, 128)
    o_ref[...] += jnp.dot(
        yf_ref[:, pl.ds(start, tk)], bp_ref[...],
        preferred_element_type=jnp.float32)


@functools.partial(jax.jit, static_argnames=("H", "W", "tile_n", "tile_k"))
def nnfbp_forward(x, wf, bp, wc, bias, *, H, W, tile_n=2048, tile_k=1024):
    """x: [B, C, A, D] (any float dtype) -> [B, 1, H, W] float32."""
    x = x.astype(jnp.float32)                       # mirrors `x = x.float()`
    B, C, A, D = x.shape
    AD = A * D
    HW = H * W

    # (1) channel combine first (all ops are linear, so this commutes): cheap
    #     VPU reduction over C, cuts the heavy matmul work by C x.
    y = jnp.einsum("bcad,c->bad", x, wc.reshape(-1).astype(jnp.float32))
    # (2) per-angle learnable detector filter -- tiny (B*A x D x D), left to XLA.
    yf = (y.reshape(B * A, D) @ wf.astype(jnp.float32)).reshape(B, AD)

    # ---- tiling & padding (lane-dense, bounded tiles) ----
    M = _round_up(B, 8)                              # unmasked sublane stores
    tn = _fit_tile(HW, tile_n)
    # Force >= 2 HW tiles when possible so the parallel axis shards across
    # both v7x TensorCores.
    if _round_up(HW, tn) // tn < 2 and tn > 128:
        tn = max(128, (tn // 2) // 128 * 128)
    tk = _fit_tile(AD, tile_k)
    HWp = _round_up(HW, tn)
    ADp = _round_up(AD, tk)
    grid = (HWp // tn, ADp // tk)                    # reduction axis last

    # bf16 streams, f32 accumulation (zero-padded rows/cols contribute 0).
    yf_p = jnp.pad(yf, ((0, M - B), (0, ADp - AD))).astype(jnp.bfloat16)
    bp_p = jnp.pad(bp.astype(jnp.float32),
                   ((0, ADp - AD), (0, HWp - HW))).astype(jnp.bfloat16)
    # out_channels == 1; extra biases (if any) would be dropped here.
    bias_scalar = bias.reshape(-1)[:1].astype(jnp.float32)

    # VMEM budget: bp double-buffered (bf16) + resident yf + f32 output tiles.
    vmem_need = (2 * tk * tn * 2
                 + 2 * M * ADp * 2
                 + 2 * M * tn * 4
                 + (4 << 20))
    vmem_limit = int(min(max(vmem_need, 32 << 20), 60 << 20))  # v7x-safe cap

    cost = pl.CostEstimate(
        flops=2 * M * ADp * HWp,
        transcendentals=0,
        bytes_accessed=2 * (M * ADp + ADp * HWp) + 4 * M * HWp,
    )

    out = pl.pallas_call(
        functools.partial(backproject_kernel, tk=tk),
        out_shape=jax.ShapeDtypeStruct((M, HWp), jnp.float32),
        grid_spec=pltpu.PrefetchScalarGridSpec(
            num_scalar_prefetch=0,
            grid=grid,
            in_specs=[
                pl.BlockSpec((M, ADp), lambda n, k: (0, 0)),        # yf resident
                pl.BlockSpec((tk, tn), lambda n, k: (k, n)),        # bp streamed
                pl.BlockSpec(memory_space=pltpu.MemorySpace.SMEM),  # bias
            ],
            out_specs=pl.BlockSpec((M, tn), lambda n, k: (0, n)),
        ),
        compiler_params=pltpu.CompilerParams(
            dimension_semantics=("parallel", "arbitrary"),
            vmem_limit_bytes=vmem_limit),
        cost_estimate=cost,
    )(yf_p, bp_p, bias_scalar)

    return out[:B, :HW].reshape(B, 1, H, W)


def nnfbp_reference(x, wf, bp, wc, bias, *, H, W):
    """Pure-JAX f32 reference (original op order) for correctness checking."""
    x = x.astype(jnp.float32)
    B, C, A, D = x.shape
    filtered = jnp.einsum("bcad,de->bcae", x, wf)                # per-angle filter
    img = jnp.einsum("bcf,fh->bch", filtered.reshape(B, C, A * D), bp)
    out = jnp.einsum("bch,c->bh", img, wc[0]) + bias[0, 0]
    return out.reshape(B, 1, H, W)


if __name__ == "__main__":
    # Small, shape-consistent example: B=2, C=4, A=16 angles, D=16 detector
    # bins, reconstructing a 16x16 image with out_channels=1.
    B, C, A, D = 2, 4, 16, 16
    H = W = 16

    key = jax.random.PRNGKey(0)
    kx, kwf, kbp, kwc, kb = jax.random.split(key, 5)

    # Deterministic parameter init (normal(0, 0.02), per _initialize_weights).
    wf = 0.02 * jax.random.normal(kwf, (D, D), jnp.float32)          # learnable filter
    bp = 0.02 * jax.random.normal(kbp, (A * D, H * W), jnp.float32)  # back-projection
    wc = 0.02 * jax.random.normal(kwc, (1, C), jnp.float32)          # channel combine
    bias = 0.02 * jax.random.normal(kb, (1, 1), jnp.float32)

    x = jax.random.normal(kx, (B, C, A, D), jnp.float32)

    ref = nnfbp_reference(x, wf, bp, wc, bias, H=H, W=W)

    # (a) small tiles: exercises the multi-k accumulator path (grid = (2, 2)).
    out_small = nnfbp_forward(x, wf, bp, wc, bias, H=H, W=W,
                              tile_n=128, tile_k=128)
    out_small = jax.block_until_ready(out_small)
    assert out_small.shape == (B, 1, H, W)
    assert jnp.allclose(out_small, ref, rtol=2e-2, atol=1e-3)

    # (b) default tile caps: exercises padding / megacore-split / single-k path.
    out_default = nnfbp_forward(x, wf, bp, wc, bias, H=H, W=W)
    out_default = jax.block_until_ready(out_default)
    assert out_default.shape == (B, 1, H, W)
    assert jnp.allclose(out_default, ref, rtol=2e-2, atol=1e-3)

    print("KERNEL_OK")
</pallas_src>

<mosaic_0001>
module attributes {stable_mosaic.version = 11 : i64} {
  func.func @backproject_kernel(%arg0: i32, %arg1: i32, %arg2: memref<8x256xbf16, #tpu.memory_space<vmem>>, %arg3: memref<128x128xbf16, #tpu.memory_space<vmem>>, %arg4: memref<1xf32, #tpu.memory_space<smem>>, %arg5: memref<8x128xf32, #tpu.memory_space<vmem>>) attributes {dimension_semantics = [#tpu.dimension_semantics<parallel>, #tpu.dimension_semantics<arbitrary>], iteration_bounds = array<i64: 2, 2>, scalar_prefetch = 0 : i64, scratch_operands = 0 : i64, tpu.core_type = #tpu.core_type<tc>, window_params = [{pipeline_mode = #tpu.pipeline_mode<synchronous>, transform_indices = @transform_0, window_bounds = array<i64: 8, 256>}, {transform_indices = @transform_1, window_bounds = array<i64: 128, 128>}, {transform_indices = @transform_2, window_bounds = array<i64: 1>}, {transform_indices = @transform_3, window_bounds = array<i64: 8, 128>}]} {
    %c0_i32 = arith.constant 0 : i32
    %0 = arith.cmpi eq, %arg1, %c0_i32 : i32
    %1 = arith.extui %0 : i1 to i32
    %c0_i32_0 = arith.constant 0 : i32
    %2 = arith.cmpi ne, %1, %c0_i32_0 : i32
    scf.if %2 {
      %cst_7 = arith.constant 0.000000e+00 : f32
      %12 = vector.broadcast %cst_7 : f32 to vector<8x128xf32>
      %c0_8 = arith.constant 0 : index
      %13 = memref.load %arg4[%c0_8] : memref<1xf32, #tpu.memory_space<smem>>
      %14 = vector.broadcast %13 : f32 to vector<8x128xf32>
      %15 = arith.addf %12, %14 : vector<8x128xf32>
      %c0_9 = arith.constant 0 : index
      %c0_10 = arith.constant 0 : index
      %16 = vector.load %arg5[%c0_9, %c0_10] : memref<8x128xf32, #tpu.memory_space<vmem>>, vector<8x128xf32>
      tpu.vector_store %arg5[%c0_9, %c0_10], %15 {strides = array<i32>} : memref<8x128xf32, #tpu.memory_space<vmem>>, vector<8x128xf32>,
    } else {
    }
    %c128_i32 = arith.constant 128 : i32
    %3 = arith.muli %arg1, %c128_i32 : i32
    %4 = tpu.assume_multiple %3, 128 : i32
    %c0 = arith.constant 0 : index
    %c0_1 = arith.constant 0 : index
    %5 = vector.load %arg5[%c0, %c0_1] : memref<8x128xf32, #tpu.memory_space<vmem>>, vector<8x128xf32>
    %c0_2 = arith.constant 0 : index
    %6 = arith.index_cast %4 : i32 to index
    %7 = vector.load %arg2[%c0_2, %6] : memref<8x256xbf16, #tpu.memory_space<vmem>>, vector<8x128xbf16>
    %c0_3 = arith.constant 0 : index
    %c0_4 = arith.constant 0 : index
    %8 = vector.load %arg3[%c0_3, %c0_4] : memref<128x128xbf16, #tpu.memory_space<vmem>>, vector<128x128xbf16>
    %cst = arith.constant dense<0.000000e+00> : vector<8x128xf32>
    %9 = tpu.matmul %7, %8, %cst {dimension_numbers = #tpu.dot_dimension_numbers<[1], [0], [0], [1], [0, 0, 1, 1], [], []>} : vector<8x128xbf16>, vector<128x128xbf16>, vector<8x128xf32> -> vector<8x128xf32>
    %10 = arith.addf %5, %9 : vector<8x128xf32>
    %c0_5 = arith.constant 0 : index
    %c0_6 = arith.constant 0 : index
    %11 = vector.load %arg5[%c0_5, %c0_6] : memref<8x128xf32, #tpu.memory_space<vmem>>, vector<8x128xf32>
    tpu.vector_store %arg5[%c0_5, %c0_6], %10 {strides = array<i32>} : memref<8x128xf32, #tpu.memory_space<vmem>>, vector<8x128xf32>,
    return
  }
  func.func @transform_0(%arg0: i32, %arg1: i32) -> (i32, i32) {
    %c0_i32 = arith.constant 0 : i32
    %c0_i32_0 = arith.constant 0 : i32
    %c0_i32_1 = arith.constant 0 : i32
    return %c0_i32, %c0_i32_0 : i32, i32
  }
  func.func @transform_1(%arg0: i32, %arg1: i32) -> (i32, i32) {
    %c0_i32 = arith.constant 0 : i32
    return %arg1, %arg0 : i32, i32
  }
  func.func @transform_2(%arg0: i32, %arg1: i32) -> i32 {
    %c0_i32 = arith.constant 0 : i32
    %c0_i32_0 = arith.constant 0 : i32
    return %c0_i32 : i32
  }
  func.func @transform_3(%arg0: i32, %arg1: i32) -> (i32, i32) {
    %c0_i32 = arith.constant 0 : i32
    %c0_i32_0 = arith.constant 0 : i32
    return %c0_i32, %arg0 : i32, i32
  }
}

</mosaic_0001>

<llo_original>
// kernel: nnfbp_forward.1
$region0: #{nnfbp_forward.1}
  #allocation0 [shape = 'u32[]', space=smem, size = 0x4, offset = 0x4, fixed_abs, tag = 'smem constant byte address 0x4 - core index']
  #allocation1 [shape = 'u32[144,128]{1,0:T(1,128)}', space=vmem, size = 0x12000, scoped, tag = 'internal scratch']
  #allocation2 [shape = 'f32[1]{0:T(128)S(6)}', space=smem, size = 0x200, scoped, tag = 'scoped memory for nnfbp_forward.1']
  %s0 = inlined_call_operand.vmem [shape: bf16[8,256], index: 0, kind: input, shape index: {}]
  %s1 = inlined_call_operand.vmem [shape: bf16[256,256], index: 1, kind: input, shape index: {}]
  %s2 = inlined_call_operand.<no memory space> [shape: f32[1], index: 2, kind: input, shape index: {}]
  %s3 = inlined_call_operand.vmem [shape: f32[8,256], index: 3, kind: output, shape index: {}]
  %s4 = sld [smem:[#allocation0]]
  $region90: #{nnfbp_forward.1} parent=0
    _
  %s6 = ssub.s32 1, %s4
  %s7 = scalar_select 0, %s6, %s4
  %8 = sst [smem:[#allocation2]] %s2
  $region1: #{nnfbp_forward.1} parent=0
    #allocation3 [shape = 'u8[65536]{0}', space=vmem, size = 0x10000, scoped, tag = 'input window, operand 1']
    loop: start=0, step=1, limit=6
    $region2: #{nnfbp_forward.1} parent=1 // loop_pre_header
      _
    $region3: #{nnfbp_forward.1} parent=1 // loop_header
      %s10 = sphi 0, %s14
      %p11 = scmp.ge.s32.totalorder %s10, 6
      %s17 = sphi 0, %s29
      %s18 = sphi 0, %s25
      %s19 = sphi 0, %s17
      %s20 = sphi 0, %s18
      %s21 = sphi 0, %s19
      %s22 = sphi 0, %s20
      %s30 = sphi 0, %s30
      %s32 = sphi 0, %s30
      %s33 = sphi 0, %s32
      %s47 = sphi 0, %s33
      %s55 = sphi 0, %s57
      %s58 = sphi 0, %s55
      %s59 = sphi 0, %s58
      %s75 = sphi 0, %s59
      %s79 = sphi 0, %s79
      %s81 = sphi 0, %s79
      %s82 = sphi 0, %s81
      %s96 = sphi 0, %s82
      %s102 = sphi 0, %s104
      %s105 = sphi 0, %s102
      %s106 = sphi 0, %s105
      %s122 = sphi 0, %s106
    $region4: #{nnfbp_forward.1} parent=1 // loop_header_branch
      %13 = sbr.rel (%p11) target = $region8
    $region5: #{nnfbp_forward.1} parent=1 // loop_body
      %s15 = ssub.s32 %s10, 1
      %s16 = ssub.s32 %s10, 2
      %s23 = sadd.s32 1, %s18
      %p24 = scmp.ge.s32.totalorder %s23, 2
      %s25 = scalar_select %p24, 0, %s23
      %s26 = sadd.s32 1, %s17
      %s27 = scalar_select %p24, %s26, %s17
      %p28 = scmp.ge.s32.totalorder %s27, 2
      %s29 = scalar_select %p28, 0, %s27
      %s31 = sadd.s32 %s30, 1
      %p34 = scmp.eq.s32.totalorder %s10, 3
      %p35 = scmp.ne.s32.totalorder %s30, %s32
      %p36 = scmp.eq.s32.totalorder %s10, 0
      %p37 = por %p35, %p36
      %p38 = scmp.ne.s32.totalorder %s30, %s32
      %p39 = scmp.eq.s32.totalorder %s15, 3
      %p40 = por %p38, %p39
      %p41 = scmp.ne.s32.totalorder %s32, %s33
      %p42 = scmp.eq.s32.totalorder %s15, 0
      %p43 = por %p41, %p42
      %p44 = scmp.ne.s32.totalorder %s32, %s33
      %p45 = scmp.eq.s32.totalorder %s16, 3
      %p46 = por %p44, %p45
      %p48 = scmp.ne.s32.totalorder %s33, %s47
      %p49 = scmp.eq.s32.totalorder %s16, 0
      %p50 = por %p48, %p49
      %s51 = ssub.s32 %s18, %s25
      %s52 = ssub.s32 %s17, %s29
      %s53 = sor.u32 %s51, %s52
      %p54 = scmp.eq.s32.totalorder %s53, 0
      %s56 = sadd.s32 %s55, 1
      %s57 = scalar_select %p54, %s55, %s56
      %p60 = pneg %p54
      %p61 = scmp.eq.s32.totalorder %s10, 3
      %p62 = por %p60, %p61
      %p63 = scmp.ne.s32.totalorder %s55, %s58
      %p64 = scmp.eq.s32.totalorder %s10, 0
      %p65 = por %p63, %p64
      %p66 = scmp.ne.s32.totalorder %s55, %s58
      %p67 = scmp.eq.s32.totalorder %s15, 3
      %p68 = por %p66, %p67
      %p69 = scmp.ne.s32.totalorder %s58, %s59
      %p70 = scmp.eq.s32.totalorder %s15, 0
      %p71 = por %p69, %p70
      %p72 = scmp.ne.s32.totalorder %s58, %s59
      %p73 = scmp.eq.s32.totalorder %s16, 3
      %p74 = por %p72, %p73
      %p76 = scmp.ne.s32.totalorder %s59, %s75
      %p77 = scmp.eq.s32.totalorder %s16, 0
      %p78 = por %p76, %p77
      %s80 = sadd.s32 %s79, 1
      %p83 = scmp.eq.s32.totalorder %s10, 3
      %p84 = scmp.ne.s32.totalorder %s79, %s81
      %p85 = scmp.eq.s32.totalorder %s10, 0
      %p86 = por %p84, %p85
      %p87 = scmp.ne.s32.totalorder %s79, %s81
      %p88 = scmp.eq.s32.totalorder %s15, 3
      %p89 = por %p87, %p88
      %p90 = scmp.ne.s32.totalorder %s81, %s82
      %p91 = scmp.eq.s32.totalorder %s15, 0
      %p92 = por %p90, %p91
      %p93 = scmp.ne.s32.totalorder %s81, %s82
      %p94 = scmp.eq.s32.totalorder %s16, 3
      %p95 = por %p93, %p94
      %p97 = scmp.ne.s32.totalorder %s82, %s96
      %p98 = scmp.eq.s32.totalorder %s16, 0
      %p99 = por %p97, %p98
      %s100 = ssub.s32 %s17, %s29
      %p101 = scmp.eq.s32.totalorder %s100, 0
      %s103 = sadd.s32 %s102, 1
      %s104 = scalar_select %p101, %s102, %s103
      %p107 = pneg %p101
      %p108 = scmp.eq.s32.totalorder %s10, 3
      %p109 = por %p107, %p108
      %p110 = scmp.ne.s32.totalorder %s102, %s105
      %p111 = scmp.eq.s32.totalorder %s10, 0
      %p112 = por %p110, %p111
      %p113 = scmp.ne.s32.totalorder %s102, %s105
      %p114 = scmp.eq.s32.totalorder %s15, 3
      %p115 = por %p113, %p114
      %p116 = scmp.ne.s32.totalorder %s105, %s106
      %p117 = scmp.eq.s32.totalorder %s15, 0
      %p118 = por %p116, %p117
      %p119 = scmp.ne.s32.totalorder %s105, %s106
      %p120 = scmp.eq.s32.totalorder %s16, 3
      %p121 = por %p119, %p120
      %p123 = scmp.ne.s32.totalorder %s106, %s122
      %p124 = scmp.eq.s32.totalorder %s16, 0
      %p125 = por %p123, %p124
      %p126 = scmp.le.s32.totalorder 1, %s10
      %p127 = scmp.lt.s32.totalorder %s10, 5
      %p128 = pnand %p126, %p127
      %p129 = pneg %p128
      // Predicated region
      $region9: #{nnfbp_forward.1} parent=5 // pred_check
        _
      $region10: #{nnfbp_forward.1} parent=5 // pred_check_branch
        %131 = sbr.rel (%p128) target = $region12
      $region11: #{nnfbp_forward.1} parent=5 // pred_region
        %s132 = ssub.s32 %s10, 1
        // Predicated region
        $region13: #{nnfbp_forward.1} parent=11 // pred_check
          %p133 = pneg %p43
        $region14: #{nnfbp_forward.1} parent=11 // pred_check_branch
          %135 = sbr.rel (%p133) target = $region16
        $region15: #{nnfbp_forward.1} parent=11 // pred_region
          _
        $region16: #{nnfbp_forward.1} parent=11 // pred_fallthru
          _
        // Predicated region
        $region17: #{nnfbp_forward.1} parent=11 // pred_check
          %p136 = pneg %p92
        $region18: #{nnfbp_forward.1} parent=11 // pred_check_branch
          %138 = sbr.rel (%p136) target = $region20
        $region19: #{nnfbp_forward.1} parent=11 // pred_region
          _
        $region20: #{nnfbp_forward.1} parent=11 // pred_fallthru
          _
      $region12: #{nnfbp_forward.1} parent=5 // pred_fallthru
        _
      %p139 = scmp.lt.s32.totalorder %s10, 4
      // Predicated region
      $region21: #{nnfbp_forward.1} parent=5 // pred_check
        %p140 = pneg %p139
      $region22: #{nnfbp_forward.1} parent=5 // pred_check_branch
        %142 = sbr.rel (%p140) target = $region24
      $region23: #{nnfbp_forward.1} parent=5 // pred_region
        // Predicated region
        $region25: #{nnfbp_forward.1} parent=23 // pred_check
          %p143 = pneg %p65
        $region26: #{nnfbp_forward.1} parent=23 // pred_check_branch
          %145 = sbr.rel (%p143) target = $region28
        $region27: #{nnfbp_forward.1} parent=23 // pred_region
          %s146 = sand.u32 %s55, 1
          %s147 = sand.u32 %s55, 1
          %s148 = smul.addr %s147, 64
          %s149 = scalar_lea.vmem [#allocation3], %s148
          %s150 = smul.u32 16, %s18
          %s151 = smul.addr %s150, 2
          %s152 = sadd.s32 %s17, %s151
          %s153 = smul.addr %s152, 4
          %s154 = scalar_lea.vmem %s1, %s153
          // Predicated region
          $region29: #{nnfbp_forward.1} parent=27 // pred_check
            _
          $region30: #{nnfbp_forward.1} parent=27 // pred_check_branch
            %156 = sbr.rel (0) target = $region32
          $region31: #{nnfbp_forward.1} parent=27 // pred_region
            // Predicated region
            $region33: #{nnfbp_forward.1} parent=31 // pred_check
              _
            $region34: #{nnfbp_forward.1} parent=31 // pred_check_branch
              %158 = sbr.rel target = $region36
            $region35: #{nnfbp_forward.1} parent=31 // pred_region
              // Predicated region
              $region48: #{nnfbp_forward.1} parent=35 // pred_check
                _
              $region49: #{nnfbp_forward.1} parent=35 // pred_check_branch
                %203 = sbr.rel (0) target = $region51
              $region50: #{nnfbp_forward.1} parent=35 // pred_region
                loop: start=0, step=1, limit=1
                $region52: #{nnfbp_forward.1} parent=50 // loop_pre_header
                  _
                $region53: #{nnfbp_forward.1} parent=50 // loop_header
                  %s205 = sphi 0, %s209
                  %p206 = scmp.ge.s32.totalorder %s205, 1
                  %s210 = sphi %s154, %s154
                  %s211 = sphi %s149, %s149
                $region54: #{nnfbp_forward.1} parent=50 // loop_header_branch
                  %208 = sbr.rel (%p206) target = $region58
                $region55: #{nnfbp_forward.1} parent=50 // loop_body
                  _
                $region56: #{nnfbp_forward.1} parent=50 // loop_footer
                  %s209 = sadd.s32 1, %s205
                $region57: #{nnfbp_forward.1} parent=50 // loop_footer_branch
                  %204 = sbr.rel target = $region53
                $region58: #{nnfbp_forward.1} parent=50 // loop_exit
                  _
                loop: start=0, step=1, limit=1
                $region59: #{nnfbp_forward.1} parent=50 // loop_pre_header
                  _
                $region60: #{nnfbp_forward.1} parent=50 // loop_header
                  %s214 = sphi 0, %s218
                  %p215 = scmp.ge.s32.totalorder %s214, 1
                  %s219 = sphi %s154, %s154
                  %s220 = sphi %s149, %s149
                $region61: #{nnfbp_forward.1} parent=50 // loop_header_branch
                  %217 = sbr.rel (%p215) target = $region65
                $region62: #{nnfbp_forward.1} parent=50 // loop_body
                  %v221 = vld [vmem:[%s219] sm:$0xf]
                  %222 = vst [vmem:[%s220] sm:$0xf] %v221
                  %v223 = vld [vmem:[%s219 + $0x8] sm:$0xf]
                  %224 = vst [vmem:[%s220 + $0x4] sm:$0xf] %v223
                  %v225 = vld [vmem:[%s219 + $0x10] sm:$0xf]
                  %226 = vst [vmem:[%s220 + $0x8] sm:$0xf] %v225
                  %v227 = vld [vmem:[%s219 + $0x18] sm:$0xf]
                  %228 = vst [vmem:[%s220 + $0xc] sm:$0xf] %v227
                  %v229 = vld [vmem:[%s219 + $0x20] sm:$0xf]
                  %230 = vst [vmem:[%s220 + $0x10] sm:$0xf] %v229
                  %v231 = vld [vmem:[%s219 + $0x28] sm:$0xf]
                  %232 = vst [vmem:[%s220 + $0x14] sm:$0xf] %v231
                  %v233 = vld [vmem:[%s219 + $0x30] sm:$0xf]
                  %234 = vst [vmem:[%s220 + $0x18] sm:$0xf] %v233
                  %v235 = vld [vmem:[%s219 + $0x38] sm:$0xf]
                  %236 = vst [vmem:[%s220 + $0x1c] sm:$0xf] %v235
                  %v237 = vld [vmem:[%s219 + $0x40] sm:$0xf]
                  %238 = vst [vmem:[%s220 + $0x20] sm:$0xf] %v237
                  %v239 = vld [vmem:[%s219 + $0x48] sm:$0xf]
                  %240 = vst [vmem:[%s220 + $0x24] sm:$0xf] %v239
                  %v241 = vld [vmem:[%s219 + $0x50] sm:$0xf]
                  %242 = vst [vmem:[%s220 + $0x28] sm:$0xf] %v241
                  %v243 = vld [vmem:[%s219 + $0x58] sm:$0xf]
                  %244 = vst [vmem:[%s220 + $0x2c] sm:$0xf] %v243
                  %v245 = vld [vmem:[%s219 + $0x60] sm:$0xf]
                  %246 = vst [vmem:[%s220 + $0x30] sm:$0xf] %v245
                  %v247 = vld [vmem:[%s219 + $0x68] sm:$0xf]
                  %248 = vst [vmem:[%s220 + $0x34] sm:$0xf] %v247
                  %v249 = vld [vmem:[%s219 + $0x70] sm:$0xf]
                  %250 = vst [vmem:[%s220 + $0x38] sm:$0xf] %v249
                  %v251 = vld [vmem:[%s219 + $0x78] sm:$0xf]
                  %252 = vst [vmem:[%s220 + $0x3c] sm:$0xf] %v251
                $region63: #{nnfbp_forward.1} parent=50 // loop_footer
                  %s218 = sadd.s32 1, %s214
                $region64: #{nnfbp_forward.1} parent=50 // loop_footer_branch
                  %213 = sbr.rel target = $region60
                $region65: #{nnfbp_forward.1} parent=50 // loop_exit
                  _
              $region51: #{nnfbp_forward.1} parent=35 // pred_fallthru
                _
            $region36: #{nnfbp_forward.1} parent=31 // pred_fallthru
              _
            // Predicated region
            $region37: #{nnfbp_forward.1} parent=31 // pred_check
              _
            $region38: #{nnfbp_forward.1} parent=31 // pred_check_branch
              %160 = sbr.rel (0) target = $region40
            $region39: #{nnfbp_forward.1} parent=31 // pred_region
              loop: start=0, step=1, limit=1
              $region41: #{nnfbp_forward.1} parent=39 // loop_pre_header
                _
              $region42: #{nnfbp_forward.1} parent=39 // loop_header
                %s163 = sphi 0, %s167
                %p164 = scmp.ge.s32.totalorder %s163, 1
                %s168 = sphi %s154, %s154
                %s169 = sphi %s149, %s149
              $region43: #{nnfbp_forward.1} parent=39 // loop_header_branch
                %166 = sbr.rel (%p164) target = $region47
              $region44: #{nnfbp_forward.1} parent=39 // loop_body
                %v170 = vld [vmem:[%s168] sm:$0xf]
                %171 = vst [vmem:[%s169] sm:$0xf] %v170
                %v172 = vld [vmem:[%s168 + $0x8] sm:$0xf]
                %173 = vst [vmem:[%s169 + $0x4] sm:$0xf] %v172
                %v174 = vld [vmem:[%s168 + $0x10] sm:$0xf]
                %175 = vst [vmem:[%s169 + $0x8] sm:$0xf] %v174
                %v176 = vld [vmem:[%s168 + $0x18] sm:$0xf]
                %177 = vst [vmem:[%s169 + $0xc] sm:$0xf] %v176
                %v178 = vld [vmem:[%s168 + $0x20] sm:$0xf]
                %179 = vst [vmem:[%s169 + $0x10] sm:$0xf] %v178
                %v180 = vld [vmem:[%s168 + $0x28] sm:$0xf]
                %181 = vst [vmem:[%s169 + $0x14] sm:$0xf] %v180
                %v182 = vld [vmem:[%s168 + $0x30] sm:$0xf]
                %183 = vst [vmem:[%s169 + $0x18] sm:$0xf] %v182
                %v184 = vld [vmem:[%s168 + $0x38] sm:$0xf]
                %185 = vst [vmem:[%s169 + $0x1c] sm:$0xf] %v184
                %v186 = vld [vmem:[%s168 + $0x40] sm:$0xf]
                %187 = vst [vmem:[%s169 + $0x20] sm:$0xf] %v186
                %v188 = vld [vmem:[%s168 + $0x48] sm:$0xf]
                %189 = vst [vmem:[%s169 + $0x24] sm:$0xf] %v188
                %v190 = vld [vmem:[%s168 + $0x50] sm:$0xf]
                %191 = vst [vmem:[%s169 + $0x28] sm:$0xf] %v190
                %v192 = vld [vmem:[%s168 + $0x58] sm:$0xf]
                %193 = vst [vmem:[%s169 + $0x2c] sm:$0xf] %v192
                %v194 = vld [vmem:[%s168 + $0x60] sm:$0xf]
                %195 = vst [vmem:[%s169 + $0x30] sm:$0xf] %v194
                %v196 = vld [vmem:[%s168 + $0x68] sm:$0xf]
                %197 = vst [vmem:[%s169 + $0x34] sm:$0xf] %v196
                %v198 = vld [vmem:[%s168 + $0x70] sm:$0xf]
                %199 = vst [vmem:[%s169 + $0x38] sm:$0xf] %v198
                %v200 = vld [vmem:[%s168 + $0x78] sm:$0xf]
                %201 = vst [vmem:[%s169 + $0x3c] sm:$0xf] %v200
              $region45: #{nnfbp_forward.1} parent=39 // loop_footer
                %s167 = sadd.s32 1, %s163
              $region46: #{nnfbp_forward.1} parent=39 // loop_footer_branch
                %162 = sbr.rel target = $region42
              $region47: #{nnfbp_forward.1} parent=39 // loop_exit
                _
            $region40: #{nnfbp_forward.1} parent=31 // pred_fallthru
              _
          $region32: #{nnfbp_forward.1} parent=27 // pred_fallthru
            _
          %253 = vnop
        $region28: #{nnfbp_forward.1} parent=23 // pred_fallthru
          _
      $region24: #{nnfbp_forward.1} parent=5 // pred_fallthru
        _
      %p254 = scmp.le.s32.totalorder 1, %s10
      %p255 = scmp.lt.s32.totalorder %s10, 5
      %p256 = pnand %p254, %p255
      %p257 = pneg %p256
      // Predicated region
      $region66: #{nnfbp_forward.1} parent=5 // pred_check
        _
      $region67: #{nnfbp_forward.1} parent=5 // pred_check_branch
        %259 = sbr.rel (%p256) target = $region69
      $region68: #{nnfbp_forward.1} parent=5 // pred_region
        %s260 = ssub.s32 %s10, 1
        %s261 = sand.u32 %s58, 1
        %s262 = sand.u32 %s58, 1
        %s263 = smul.addr %s262, 64
        %s264 = scalar_lea.vmem [#allocation3], %s263
        // Predicated region
        $region70: #{nnfbp_forward.1} parent=68 // pred_check
          %p265 = pneg %p71
        $region71: #{nnfbp_forward.1} parent=68 // pred_check_branch
          %267 = sbr.rel (%p265) target = $region73
        $region72: #{nnfbp_forward.1} parent=68 // pred_region
          _
        $region73: #{nnfbp_forward.1} parent=68 // pred_fallthru
          _
        %p268 = pneg %p43
        %p269 = pneg %p40
        %s270 = sand.u32 %s58, 1
        %s271 = sand.u32 %s58, 1
        %s272 = smul.addr %s271, 64
        %s273 = scalar_lea.vmem [#allocation3], %s272
        %p274 = pneg %p71
        %p275 = pneg %p68
        %p276 = pneg %p92
        %p277 = pneg %p89
        %p278 = pneg %p118
        %p279 = pneg %p115
        %p280 = scmp.lt.s32.totalorder %s19, 1
        %s281 = scalar_select %p280, %s19, 1
        %s282 = smul.addr %s281, 8
        %s283 = scalar_lea.vmem %s3, %s282
        %s284 = smul.u32 16, %s20
        %p285 = scmp.lt.s32.totalorder %s19, 1
        %s286 = scalar_select %p285, %s19, 1
        %s287 = smul.addr %s286, 8
        %s288 = scalar_lea.vmem %s3, %s287
        %p290 = scmp.eq.s32.totalorder %s20, 0
        // Predicated region
        $region74: #{nnfbp_forward.1} parent=68 // pred_check
          %p291 = pneg %p290
        $region75: #{nnfbp_forward.1} parent=68 // pred_check_branch
          %293 = sbr.rel (%p291) target = $region77
        $region76: #{nnfbp_forward.1} parent=68 // pred_region
          %s294 = sld [smem:[#allocation2]]
          %v295 = vstv %s294
          %v296 = vadd.f32 %v295, 0.0
          %297 = vst [vmem:[%s288] sm:$0xff] %v296
        $region77: #{nnfbp_forward.1} parent=68 // pred_fallthru
          _
        %s298 = smul.u32 %s20, 128
        %v299 = vld [vmem:[%s288] sm:$0xff]
        %s300 = sshra.s32 %s298, 7
        %s301 = sand.u32 %s298, 127
        %s302 = smul.addr %s300, 4
        %s303 = scalar_lea.vmem %s0, %s302
        %v304 = vld [vmem:[%s303] sm:$0xf]
        %v305 = vld [vmem:[%s264] sm:$0xf]
        %v306 = vld [vmem:[%s264 + $0x4] sm:$0xf]
        %v307 = vld [vmem:[%s264 + $0x8] sm:$0xf]
        %v308 = vld [vmem:[%s264 + $0xc] sm:$0xf]
        %v309 = vld [vmem:[%s264 + $0x10] sm:$0xf]
        %v310 = vld [vmem:[%s264 + $0x14] sm:$0xf]
        %v311 = vld [vmem:[%s264 + $0x18] sm:$0xf]
        %v312 = vld [vmem:[%s264 + $0x1c] sm:$0xf]
        %v313 = vld [vmem:[%s264 + $0x20] sm:$0xf]
        %v314 = vld [vmem:[%s264 + $0x24] sm:$0xf]
        %v315 = vld [vmem:[%s264 + $0x28] sm:$0xf]
        %v316 = vld [vmem:[%s264 + $0x2c] sm:$0xf]
        %v317 = vld [vmem:[%s264 + $0x30] sm:$0xf]
        %v318 = vld [vmem:[%s264 + $0x34] sm:$0xf]
        %v319 = vld [vmem:[%s264 + $0x38] sm:$0xf]
        %v320 = vld [vmem:[%s264 + $0x3c] sm:$0xf]
        %v337 = vunpack.c.l.b16 %v305
        %v338 = vunpack.c.l.b16 %v306
        %v339 = vunpack.c.l.b16 %v307
        %v340 = vunpack.c.l.b16 %v308
        %v341 = vunpack.c.l.b16 %v309
        %v342 = vunpack.c.l.b16 %v310
        %v343 = vunpack.c.l.b16 %v311
        %v344 = vunpack.c.l.b16 %v312
        %v345 = vunpack.c.l.b16 %v313
        %v346 = vunpack.c.l.b16 %v314
        %v347 = vunpack.c.l.b16 %v315
        %v348 = vunpack.c.l.b16 %v316
        %v349 = vunpack.c.l.b16 %v317
        %v350 = vunpack.c.l.b16 %v318
        %v351 = vunpack.c.l.b16 %v319
        %v352 = vunpack.c.l.b16 %v320
        %v353 = vpack.c.b16 %v338, %v337
        %v354 = vpack.c.b16 %v340, %v339
        %v355 = vpack.c.b16 %v342, %v341
        %v356 = vpack.c.b16 %v344, %v343
        %v357 = vpack.c.b16 %v346, %v345
        %v358 = vpack.c.b16 %v348, %v347
        %v359 = vpack.c.b16 %v350, %v349
        %v360 = vpack.c.b16 %v352, %v351
        %369 = vmatprep.subr.bf16.mxu0 0
        %370 = vmatpush1.bf16.msra.mxu0 %v353
        %371 = vmatprep.subr.bf16.mxu0 0
        %372 = vmatpush1.bf16.msra.mxu0 %v354
        %373 = vmatprep.subr.bf16.mxu0 0
        %374 = vmatpush1.bf16.msra.mxu0 %v355
        %375 = vmatprep.subr.bf16.mxu0 0
        %376 = vmatpush1.bf16.msra.mxu0 %v356
        %377 = vmatprep.subr.bf16.mxu0 0
        %378 = vmatpush1.bf16.msra.mxu0 %v357
        %379 = vmatprep.subr.bf16.mxu0 0
        %380 = vmatpush1.bf16.msra.mxu0 %v358
        %381 = vmatprep.subr.bf16.mxu0 0
        %382 = vmatpush1.bf16.msra.mxu0 %v359
        %383 = vmatprep.subr.bf16.mxu0 0
        %384 = vmatpush1.bf16.msra.mxu0 %v360
        %385 = vmatprep.subr.bf16.mxu0 0
        %386 = vmatpush1.bf16.msra.mxu0 0
        %387 = vmatprep.subr.bf16.mxu0 0
        %388 = vmatpush1.bf16.msra.mxu0 0
        %389 = vmatprep.subr.bf16.mxu0 0
        %390 = vmatpush1.bf16.msra.mxu0 0
        %391 = vmatprep.subr.bf16.mxu0 0
        %392 = vmatpush1.bf16.msra.mxu0 0
        %393 = vmatprep.subr.bf16.mxu0 0
        %394 = vmatpush1.bf16.msra.mxu0 0
        %395 = vmatprep.subr.bf16.mxu0 0
        %396 = vmatpush1.bf16.msra.mxu0 0
        %397 = vmatprep.subr.bf16.mxu0 0
        %398 = vmatpush1.bf16.msra.mxu0 0
        %399 = vmatprep.subr.bf16.mxu0 0
        %400 = vmatpush1.bf16.msra.mxu0 0
        %401 = vmatprep.mubr.bf16.mxu0 0
        %402 = vmatmul.mubr.bf16.gmra.mrb[0].mxu0 %v304
        %v403 = vpop.f32.mrb[0].mxu0
        %v404 = vadd.f32 0.0, %v403
        %v405 = vpop.f32.mrb[0].mxu0
        %v406 = vpop.f32.mrb[0].mxu0
        %v407 = vpop.f32.mrb[0].mxu0
        %408 = vdwg.mxu0
        %v409 = vadd.f32 %v299, %v404
        %410 = vst [vmem:[%s288] sm:$0xff] %v409
        %p411 = scmp.lt.s32.totalorder %s19, 1
        %s412 = scalar_select %p411, %s19, 1
        %s413 = smul.addr %s412, 8
        %s414 = scalar_lea.vmem %s3, %s413
        // Predicated region
        $region78: #{nnfbp_forward.1} parent=68 // pred_check
          %p415 = pneg %p115
        $region79: #{nnfbp_forward.1} parent=68 // pred_check_branch
          %417 = sbr.rel (%p415) target = $region81
        $region80: #{nnfbp_forward.1} parent=68 // pred_region
          _
        $region81: #{nnfbp_forward.1} parent=68 // pred_fallthru
          _
      $region69: #{nnfbp_forward.1} parent=5 // pred_fallthru
        _
      %p418 = scmp.le.s32.totalorder 2, %s10
      // Predicated region
      $region82: #{nnfbp_forward.1} parent=5 // pred_check
        %p419 = pneg %p418
      $region83: #{nnfbp_forward.1} parent=5 // pred_check_branch
        %421 = sbr.rel (%p419) target = $region85
      $region84: #{nnfbp_forward.1} parent=5 // pred_region
        %s422 = ssub.s32 %s10, 2
        // Predicated region
        $region86: #{nnfbp_forward.1} parent=84 // pred_check
          %p423 = pneg %p121
        $region87: #{nnfbp_forward.1} parent=84 // pred_check_branch
          %425 = sbr.rel (%p423) target = $region89
        $region88: #{nnfbp_forward.1} parent=84 // pred_region
          %p426 = scmp.lt.s32.totalorder %s21, 1
          %s427 = scalar_select %p426, %s21, 1
          %s428 = smul.addr %s427, 8
          %s429 = scalar_lea.vmem %s3, %s428
        $region89: #{nnfbp_forward.1} parent=84 // pred_fallthru
          _
      $region85: #{nnfbp_forward.1} parent=5 // pred_fallthru
        _
    $region6: #{nnfbp_forward.1} parent=1 // loop_footer
      %s14 = sadd.s32 1, %s10
    $region7: #{nnfbp_forward.1} parent=1 // loop_footer_branch
      %9 = sbr.rel target = $region3
    $region8: #{nnfbp_forward.1} parent=1 // loop_exit
      _

</llo_original>
